<compile_context>
chip_gen: v6e
topology: v6e:2x2x1
jax: 0.10.0
libtpu: 0.0.40
codegen_flags: <defaults>
</compile_context>

<pallas_src>
import jax
import jax.numpy as jnp
from jax.experimental import pallas as pl
from jax.experimental.pallas import tpu as pltpu


def _round_up(x: int, m: int) -> int:
    return ((x + m - 1) // m) * m


# ---------------------------------------------------------------------------
# Kernel: fused 3-layer MLP (3 matmuls + 2 bias-adds/ReLUs + bias-add) per tile.
# ---------------------------------------------------------------------------
def mlp_kernel(x_ref, w1_ref, b1_ref, w2_ref, b2_ref, w3_ref, b3_ref, out_ref):
    x = x_ref[...]                                                   # (bm, d_in)

    h1 = jnp.dot(x, w1_ref[...], preferred_element_type=jnp.float32)
    h1 = jnp.maximum(h1 + b1_ref[...], 0.0)                          # f32 bias/ReLU
    h1 = h1.astype(w2_ref.dtype)                                     # bf16 path if enabled

    h2 = jnp.dot(h1, w2_ref[...], preferred_element_type=jnp.float32)
    h2 = jnp.maximum(h2 + b2_ref[...], 0.0)
    h2 = h2.astype(w3_ref.dtype)

    y = jnp.dot(h2, w3_ref[...], preferred_element_type=jnp.float32)
    out_ref[...] = (y + b3_ref[...]).astype(out_ref.dtype)           # (bm, d_out)


# ---------------------------------------------------------------------------
# Parameter preparation: optional bf16 cast for matmul operands, biases f32.
# No feature-dim padding (done once, outside the hot path anyway).
# ---------------------------------------------------------------------------
def prepare_params(params, compute_dtype=jnp.float32):
    d_in, hidden = params["w1"].shape
    d_out = params["w3"].shape[1]
    return {
        "w1": params["w1"].astype(compute_dtype),
        "w2": params["w2"].astype(compute_dtype),
        "w3": params["w3"].astype(compute_dtype),
        "b1": params["b1"].astype(jnp.float32),
        "b2": params["b2"].astype(jnp.float32),
        "b3": params["b3"].astype(jnp.float32),
        "d_in": d_in, "d_out": d_out, "hidden": hidden,
        "compute_dtype": compute_dtype,
    }


def default_compute_dtype():
    """bf16 matmul inputs on v6e/v7x (MXU-rate path); f32 otherwise."""
    try:
        kind = jax.devices()[0].device_kind.lower()
        return jnp.float32 if "v5" in kind else jnp.bfloat16
    except Exception:  # pragma: no cover - conservative fallback
        return jnp.float32


# ---------------------------------------------------------------------------
# Wrapper: tile selection, pallas_call with full-dim (unpadded) feature blocks.
# ---------------------------------------------------------------------------
def mlp_forward(x, prepared, *, bm=None):
    """x: (B, input_dim) float32.  prepared: output of prepare_params()."""
    B, d_in = x.shape
    assert d_in == prepared["d_in"], "feature dim mismatch"

    hidden = prepared["hidden"]
    d_out = prepared["d_out"]
    cdt = prepared["compute_dtype"]

    # Batch tile:
    #   * small batches: one grid step over the whole batch (rounded to the
    #     sublane packing: 16 rows for bf16, 8 for f32);
    #   * large batches: big tiles (up to 1024 rows) to amortize per-step
    #     overhead, capped so the grid stays >= 2 (both v7x TensorCores get
    #     work via the "parallel" grid axis).  Multiples of 256 fill the
    #     256-wide MXU on v6e/v7x and are 128-multiples for v5e.
    if bm is None:
        align = 16 if cdt == jnp.bfloat16 else 8
        if B <= 256:
            bm = _round_up(B, align)
        else:
            bm = min(1024, _round_up(pl.cdiv(B, 2), 256))

    grid = (pl.cdiv(B, bm),)     # no batch padding: Pallas handles the ragged
                                 # last block; rows are independent, so the
                                 # overhang never contaminates valid outputs.

    x_c = x.astype(cdt)          # single cheap cast (no-op for f32)

    w1, b1 = prepared["w1"], prepared["b1"]
    w2, b2 = prepared["w2"], prepared["b2"]
    w3, b3 = prepared["w3"], prepared["b3"]

    itemsize = jnp.dtype(cdt).itemsize
    weight_bytes = (w1.size + w2.size + w3.size) * itemsize \
        + (b1.size + b2.size + b3.size) * 4
    cost = pl.CostEstimate(
        flops=2 * B * (d_in * hidden + hidden * hidden + hidden * d_out),
        transcendentals=0,
        bytes_accessed=B * d_in * itemsize + weight_bytes + B * d_out * 4,
    )

    out = pl.pallas_call(
        mlp_kernel,
        out_shape=jax.ShapeDtypeStruct((B, d_out), jnp.float32),
        grid_spec=pltpu.PrefetchScalarGridSpec(
            num_scalar_prefetch=0,
            grid=grid,
            in_specs=[
                pl.BlockSpec((bm, d_in), lambda i: (i, 0)),        # x tile (full-dim K)
                pl.BlockSpec((d_in, hidden), lambda i: (0, 0)),    # W1 (resident)
                pl.BlockSpec((1, hidden), lambda i: (0, 0)),       # b1
                pl.BlockSpec((hidden, hidden), lambda i: (0, 0)),  # W2 (resident)
                pl.BlockSpec((1, hidden), lambda i: (0, 0)),       # b2
                pl.BlockSpec((hidden, d_out), lambda i: (0, 0)),   # W3 (resident)
                pl.BlockSpec((1, d_out), lambda i: (0, 0)),        # b3
            ],
            out_specs=pl.BlockSpec((bm, d_out), lambda i: (i, 0)),  # (bm, d_out), no lane pad
        ),
        compiler_params=pltpu.CompilerParams(
            dimension_semantics=("parallel",)),
        cost_estimate=cost,
    )(x_c, w1, b1, w2, b2, w3, b3)

    return out


# ---------------------------------------------------------------------------
# Deterministic init mimicking nn.Linear's uniform(-1/sqrt(fan_in), 1/sqrt(fan_in)).
# Weights stored as (in, out), i.e. already transposed relative to PyTorch.
# ---------------------------------------------------------------------------
def init_params(key, input_dim, output_dim, hidden=256):
    ks = jax.random.split(key, 6)

    def lin(kw, kb, fan_in, fan_out):
        bound = 1.0 / jnp.sqrt(fan_in)
        w = jax.random.uniform(kw, (fan_in, fan_out), jnp.float32, -bound, bound)
        b = jax.random.uniform(kb, (1, fan_out), jnp.float32, -bound, bound)
        return w, b

    w1, b1 = lin(ks[0], ks[1], input_dim, hidden)
    w2, b2 = lin(ks[2], ks[3], hidden, hidden)
    w3, b3 = lin(ks[4], ks[5], hidden, output_dim)
    return {"w1": w1, "b1": b1, "w2": w2, "b2": b2, "w3": w3, "b3": b3}


def mlp_reference(x, p):
    h1 = jnp.maximum(x @ p["w1"] + p["b1"], 0.0)
    h2 = jnp.maximum(h1 @ p["w2"] + p["b2"], 0.0)
    return h2 @ p["w3"] + p["b3"]


# TODO(synk): training (MSE loss / Adam / DataParallel) and format_dataset are
# host-side utilities with no kernel equivalent; only forward() is implemented.

if __name__ == "__main__":
    key = jax.random.PRNGKey(0)
    k_param, k_x_small, k_x_big = jax.random.split(key, 3)

    # dvrkCurrEstDNN feeds history-stacked joint states; representative dims:
    input_dim, output_dim = 12, 6
    params = init_params(k_param, input_dim, output_dim)
    prepared_f32 = prepare_params(params, compute_dtype=jnp.float32)

    # --- small batch: single grid step, whole batch in one tile ---
    batch_small = 16
    x_small = jax.random.normal(k_x_small, (batch_small, input_dim), jnp.float32)
    out_small = jax.block_until_ready(mlp_forward(x_small, prepared_f32))
    ref_small = mlp_reference(x_small, params)
    assert out_small.shape == (batch_small, output_dim)
    assert jnp.allclose(out_small, ref_small, atol=1e-4, rtol=1e-4), "f32 small-batch mismatch"

    # --- larger batch: grid length 2 (both v7x cores busy), ragged last block ---
    batch_big = 384
    x_big = jax.random.normal(k_x_big, (batch_big, input_dim), jnp.float32)
    out_big = jax.block_until_ready(mlp_forward(x_big, prepared_f32))
    ref_big = mlp_reference(x_big, params)
    assert out_big.shape == (batch_big, output_dim)
    assert jnp.allclose(out_big, ref_big, atol=1e-4, rtol=1e-4), "f32 large-batch mismatch"

    # --- bf16 weights/activations (f32 accumulation): v6e/v7x MXU-rate path ---
    prepared_bf16 = prepare_params(params, compute_dtype=jnp.bfloat16)
    out_bf16 = jax.block_until_ready(mlp_forward(x_big, prepared_bf16))
    assert out_bf16.shape == (batch_big, output_dim)
    assert jnp.allclose(out_bf16, ref_big, atol=2.5e-1, rtol=5e-2), "bf16 mismatch vs f32 ref"

    print("KERNEL_OK")
</pallas_src>

<mosaic_0001>
module attributes {stable_mosaic.version = 11 : i64} {
  func.func @mlp_kernel(%arg0: i32, %arg1: memref<16x12xf32, #tpu.memory_space<vmem>>, %arg2: memref<12x256xf32, #tpu.memory_space<vmem>>, %arg3: memref<1x256xf32, #tpu.memory_space<vmem>>, %arg4: memref<256x256xf32, #tpu.memory_space<vmem>>, %arg5: memref<1x256xf32, #tpu.memory_space<vmem>>, %arg6: memref<256x6xf32, #tpu.memory_space<vmem>>, %arg7: memref<1x6xf32, #tpu.memory_space<vmem>>, %arg8: memref<16x6xf32, #tpu.memory_space<vmem>>) attributes {dimension_semantics = [#tpu.dimension_semantics<parallel>], iteration_bounds = array<i64: 1>, scalar_prefetch = 0 : i64, scratch_operands = 0 : i64, tpu.core_type = #tpu.core_type<tc>, window_params = [{transform_indices = @transform_0, window_bounds = array<i64: 16, 12>}, {pipeline_mode = #tpu.pipeline_mode<synchronous>, transform_indices = @transform_1, window_bounds = array<i64: 12, 256>}, {pipeline_mode = #tpu.pipeline_mode<synchronous>, transform_indices = @transform_2, window_bounds = array<i64: 1, 256>}, {pipeline_mode = #tpu.pipeline_mode<synchronous>, transform_indices = @transform_3, window_bounds = array<i64: 256, 256>}, {pipeline_mode = #tpu.pipeline_mode<synchronous>, transform_indices = @transform_4, window_bounds = array<i64: 1, 256>}, {pipeline_mode = #tpu.pipeline_mode<synchronous>, transform_indices = @transform_5, window_bounds = array<i64: 256, 6>}, {pipeline_mode = #tpu.pipeline_mode<synchronous>, transform_indices = @transform_6, window_bounds = array<i64: 1, 6>}, {transform_indices = @transform_7, window_bounds = array<i64: 16, 6>}]} {
    %c0 = arith.constant 0 : index
    %c0_0 = arith.constant 0 : index
    %0 = vector.load %arg1[%c0, %c0_0] : memref<16x12xf32, #tpu.memory_space<vmem>>, vector<16x12xf32>
    %c0_1 = arith.constant 0 : index
    %c0_2 = arith.constant 0 : index
    %1 = vector.load %arg2[%c0_1, %c0_2] : memref<12x256xf32, #tpu.memory_space<vmem>>, vector<12x256xf32>
    %cst = arith.constant dense<0.000000e+00> : vector<16x256xf32>
    %2 = tpu.matmul %0, %1, %cst {dimension_numbers = #tpu.dot_dimension_numbers<[1], [0], [0], [1], [0, 0, 1, 1], [], []>} : vector<16x12xf32>, vector<12x256xf32>, vector<16x256xf32> -> vector<16x256xf32>
    %c0_3 = arith.constant 0 : index
    %c0_4 = arith.constant 0 : index
    %3 = vector.load %arg3[%c0_3, %c0_4] : memref<1x256xf32, #tpu.memory_space<vmem>>, vector<1x256xf32>
    %4 = vector.broadcast %3 : vector<1x256xf32> to vector<16x256xf32>
    %5 = arith.addf %2, %4 : vector<16x256xf32>
    %cst_5 = arith.constant 0.000000e+00 : f32
    %6 = vector.broadcast %cst_5 : f32 to vector<16x256xf32>
    %7 = arith.maximumf %5, %6 : vector<16x256xf32>
    %c0_6 = arith.constant 0 : index
    %c0_7 = arith.constant 0 : index
    %8 = vector.load %arg4[%c0_6, %c0_7] : memref<256x256xf32, #tpu.memory_space<vmem>>, vector<256x256xf32>
    %cst_8 = arith.constant dense<0.000000e+00> : vector<16x256xf32>
    %9 = tpu.matmul %7, %8, %cst_8 {dimension_numbers = #tpu.dot_dimension_numbers<[1], [0], [0], [1], [0, 0, 1, 1], [], []>} : vector<16x256xf32>, vector<256x256xf32>, vector<16x256xf32> -> vector<16x256xf32>
    %c0_9 = arith.constant 0 : index
    %c0_10 = arith.constant 0 : index
    %10 = vector.load %arg5[%c0_9, %c0_10] : memref<1x256xf32, #tpu.memory_space<vmem>>, vector<1x256xf32>
    %11 = vector.broadcast %10 : vector<1x256xf32> to vector<16x256xf32>
    %12 = arith.addf %9, %11 : vector<16x256xf32>
    %cst_11 = arith.constant 0.000000e+00 : f32
    %13 = vector.broadcast %cst_11 : f32 to vector<16x256xf32>
    %14 = arith.maximumf %12, %13 : vector<16x256xf32>
    %c0_12 = arith.constant 0 : index
    %c0_13 = arith.constant 0 : index
    %15 = vector.load %arg6[%c0_12, %c0_13] : memref<256x6xf32, #tpu.memory_space<vmem>>, vector<256x6xf32>
    %cst_14 = arith.constant dense<0.000000e+00> : vector<16x6xf32>
    %16 = tpu.matmul %14, %15, %cst_14 {dimension_numbers = #tpu.dot_dimension_numbers<[1], [0], [0], [1], [0, 0, 1, 1], [], []>} : vector<16x256xf32>, vector<256x6xf32>, vector<16x6xf32> -> vector<16x6xf32>
    %c0_15 = arith.constant 0 : index
    %c0_16 = arith.constant 0 : index
    %17 = vector.load %arg7[%c0_15, %c0_16] : memref<1x6xf32, #tpu.memory_space<vmem>>, vector<1x6xf32>
    %18 = vector.broadcast %17 : vector<1x6xf32> to vector<16x6xf32>
    %19 = arith.addf %16, %18 : vector<16x6xf32>
    %c0_17 = arith.constant 0 : index
    %c0_18 = arith.constant 0 : index
    %20 = vector.load %arg8[%c0_17, %c0_18] : memref<16x6xf32, #tpu.memory_space<vmem>>, vector<16x6xf32>
    tpu.vector_store %arg8[%c0_17, %c0_18], %19 {strides = array<i32>} : memref<16x6xf32, #tpu.memory_space<vmem>>, vector<16x6xf32>,
    return
  }
  func.func @transform_0(%arg0: i32) -> (i32, i32) {
    %c0_i32 = arith.constant 0 : i32
    %c0_i32_0 = arith.constant 0 : i32
    return %arg0, %c0_i32 : i32, i32
  }
  func.func @transform_1(%arg0: i32) -> (i32, i32) {
    %c0_i32 = arith.constant 0 : i32
    %c0_i32_0 = arith.constant 0 : i32
    %c0_i32_1 = arith.constant 0 : i32
    return %c0_i32, %c0_i32_0 : i32, i32
  }
  func.func @transform_2(%arg0: i32) -> (i32, i32) {
    %c0_i32 = arith.constant 0 : i32
    %c0_i32_0 = arith.constant 0 : i32
    %c0_i32_1 = arith.constant 0 : i32
    return %c0_i32, %c0_i32_0 : i32, i32
  }
  func.func @transform_3(%arg0: i32) -> (i32, i32) {
    %c0_i32 = arith.constant 0 : i32
    %c0_i32_0 = arith.constant 0 : i32
    %c0_i32_1 = arith.constant 0 : i32
    return %c0_i32, %c0_i32_0 : i32, i32
  }
  func.func @transform_4(%arg0: i32) -> (i32, i32) {
    %c0_i32 = arith.constant 0 : i32
    %c0_i32_0 = arith.constant 0 : i32
    %c0_i32_1 = arith.constant 0 : i32
    return %c0_i32, %c0_i32_0 : i32, i32
  }
  func.func @transform_5(%arg0: i32) -> (i32, i32) {
    %c0_i32 = arith.constant 0 : i32
    %c0_i32_0 = arith.constant 0 : i32
    %c0_i32_1 = arith.constant 0 : i32
    return %c0_i32, %c0_i32_0 : i32, i32
  }
  func.func @transform_6(%arg0: i32) -> (i32, i32) {
    %c0_i32 = arith.constant 0 : i32
    %c0_i32_0 = arith.constant 0 : i32
    %c0_i32_1 = arith.constant 0 : i32
    return %c0_i32, %c0_i32_0 : i32, i32
  }
  func.func @transform_7(%arg0: i32) -> (i32, i32) {
    %c0_i32 = arith.constant 0 : i32
    %c0_i32_0 = arith.constant 0 : i32
    return %arg0, %c0_i32 : i32, i32
  }
}

</mosaic_0001>

<llo_original>
// kernel: tpu_custom_call.1
$region0: #{tpu_custom_call.1}
  #allocation0 [shape = 'u32[]', space=smem, size = 0x4, offset = 0x4, fixed_abs, tag = 'smem constant byte address 0x4 - core index']
  #allocation1 [shape = 'u32[144,128]{1,0:T(1,128)}', space=vmem, size = 0x12000, scoped, tag = 'internal scratch']
  %s0 = inlined_call_operand.vmem [shape: f32[16,12], index: 0, kind: input, shape index: {}]
  %s1 = inlined_call_operand.vmem [shape: f32[12,256], index: 1, kind: input, shape index: {}]
  %s2 = inlined_call_operand.vmem [shape: f32[1,256], index: 2, kind: input, shape index: {}]
  %s3 = inlined_call_operand.hbm [shape: f32[256,256], index: 3, kind: input, shape index: {}]
  %s4 = inlined_call_operand.vmem [shape: f32[1,256], index: 4, kind: input, shape index: {}]
  %s5 = inlined_call_operand.vmem [shape: f32[256,6], index: 5, kind: input, shape index: {}]
  %s6 = inlined_call_operand.vmem [shape: f32[1,6], index: 6, kind: input, shape index: {}]
  %s7 = inlined_call_operand.vmem [shape: f32[16,6], index: 7, kind: output, shape index: {}]
  %s8 = sld [smem:[#allocation0]]
  $region42: #{tpu_custom_call.1} parent=0
    _
  %s10 = ssub.s32 1, %s8
  %s11 = scalar_select 0, %s10, %s8
  $region1: #{tpu_custom_call.1} parent=0
    #allocation2 [shape = 'u8[262144]{0}', space=vmem, size = 0x40000, scoped, tag = 'input window, operand 3, single buffered']
    #allocation3 [shape = 's32[1]{0}', space=sflag, size = 0x4, scoped, tag = 'scoped memory for tpu_custom_call.1']
    %12 = vsyncpa [#allocation3], 0
    // Predicated region
    $region2: #{tpu_custom_call.1} parent=1 // pred_check
      _
    $region3: #{tpu_custom_call.1} parent=1 // pred_check_branch
      %14 = sbr.rel (0) target = $region5
    $region4: #{tpu_custom_call.1} parent=1 // pred_region
      _
    $region5: #{tpu_custom_call.1} parent=1 // pred_fallthru
      _
    // Predicated region
    $region6: #{tpu_custom_call.1} parent=1 // pred_check
      _
    $region7: #{tpu_custom_call.1} parent=1 // pred_check_branch
      %16 = sbr.rel (0) target = $region9
    $region8: #{tpu_custom_call.1} parent=1 // pred_region
      _
    $region9: #{tpu_custom_call.1} parent=1 // pred_fallthru
      _
    // Predicated region
    $region10: #{tpu_custom_call.1} parent=1 // pred_check
      _
    $region11: #{tpu_custom_call.1} parent=1 // pred_check_branch
      %18 = sbr.rel (0) target = $region13
    $region12: #{tpu_custom_call.1} parent=1 // pred_region
      _
    $region13: #{tpu_custom_call.1} parent=1 // pred_fallthru
      _
    // Predicated region
    $region14: #{tpu_custom_call.1} parent=1 // pred_check
      _
    $region15: #{tpu_custom_call.1} parent=1 // pred_check_branch
      %20 = sbr.rel (0) target = $region17
    $region16: #{tpu_custom_call.1} parent=1 // pred_region
      %s22 = ssub.s32 8192, 8192
      %23 = vsyncadd [#allocation3], %s22
      %s24 = sshll.u32 [#allocation2], 4
      %s25 = int_to_ptr.vmem [resolvable:$true] %s24
      %30 = dma.hbm_to_vmem [thread:$0]  %s3, 8192, %s25, [#allocation3], 256, 256, 16
    $region17: #{tpu_custom_call.1} parent=1 // pred_fallthru
      _
    // Predicated region
    $region18: #{tpu_custom_call.1} parent=1 // pred_check
      _
    $region19: #{tpu_custom_call.1} parent=1 // pred_check_branch
      %32 = sbr.rel (0) target = $region21
    $region20: #{tpu_custom_call.1} parent=1 // pred_region
      _
    $region21: #{tpu_custom_call.1} parent=1 // pred_fallthru
      _
    // Predicated region
    $region22: #{tpu_custom_call.1} parent=1 // pred_check
      _
    $region23: #{tpu_custom_call.1} parent=1 // pred_check_branch
      %34 = sbr.rel (0) target = $region25
    $region24: #{tpu_custom_call.1} parent=1 // pred_region
      _
    $region25: #{tpu_custom_call.1} parent=1 // pred_fallthru
      _
    // Predicated region
    $region26: #{tpu_custom_call.1} parent=1 // pred_check
      _
    $region27: #{tpu_custom_call.1} parent=1 // pred_check_branch
      %36 = sbr.rel (0) target = $region29
    $region28: #{tpu_custom_call.1} parent=1 // pred_region
      _
    $region29: #{tpu_custom_call.1} parent=1 // pred_fallthru
      _
    // Predicated region
    $region30: #{tpu_custom_call.1} parent=1 // pred_check
      _
    $region31: #{tpu_custom_call.1} parent=1 // pred_check_branch
      %38 = sbr.rel (0) target = $region33
    $region32: #{tpu_custom_call.1} parent=1 // pred_region
      %39 = dma.done [#allocation3], 8192
    $region33: #{tpu_custom_call.1} parent=1 // pred_fallthru
      _
    %v40 = vld [vmem:[%s0] sm:$0xff]
    %v41 = vld [vmem:[%s0 + $0x8] sm:$0xff]
    %v42 = vld [vmem:[%s1] sm:$0xff]
    %v43 = vld [vmem:[%s1 + $0x8] sm:$0xff]
    %v44 = vld [vmem:[%s1 + $0x10] sm:$0xf]
    %v45 = vld [vmem:[%s1 + $0x18] sm:$0xf]
    %v46 = vld [vmem:[%s2] sm:$0x3]
    %v48 = vlaneseq
    %v49 = vshrl.u32 %v48, 7
    %v50 = vsub.s32 0, %v49
    %v51 = vrot.slane %v46, %v50
    %v52 = vlaneseq
    %v53 = vshrl.u32 %v52, 7
    %v54 = vsub.s32 1, %v53
    %v55 = vrot.slane %v46, %v54
    %vm58 = vcmask 97280
    %v60 = vsel %vm58, %v40, 0
    %v63 = vsel %vm58, %v41, 0
    %vm65 = vcmask 1043456
    %v67 = vsel %vm65, %v44, 0
    %v70 = vsel %vm65, %v45, 0
    %72 = vmatprep.subr.mxu0 0.0
    %73 = vmatpush1.msra.mxu0 0.0
    %74 = vmatprep.subr.mxu0 0.0
    %75 = vmatpush1.msra.mxu0 0.0
    %76 = vmatprep.subr.mxu0 0.0
    %77 = vmatpush1.msra.mxu0 0.0
    %78 = vmatprep.subr.mxu0 0.0
    %79 = vmatpush1.msra.mxu0 0.0
    %80 = vmatprep.subr.mxu0 0.0
    %81 = vmatpush1.msra.mxu0 0.0
    %82 = vmatprep.subr.mxu0 0.0
    %83 = vmatpush1.msra.mxu0 0.0
    %84 = vmatprep.subr.mxu0 0.0
    %85 = vmatpush1.msra.mxu0 0.0
    %86 = vmatprep.subr.mxu0 0.0
    %87 = vmatpush1.msra.mxu0 0.0
    %88 = vmatprep.subr.mxu0 0.0
    %89 = vmatpush1.msra.mxu0 0.0
    %90 = vmatprep.subr.mxu0 0.0
    %91 = vmatpush1.msra.mxu0 0.0
    %92 = vmatprep.subr.mxu0 0.0
    %93 = vmatpush1.msra.mxu0 0.0
    %94 = vmatprep.subr.mxu0 0.0
    %95 = vmatpush1.msra.mxu0 0.0
    %96 = vmatprep.subr.mxu0 0.0
    %97 = vmatpush1.msra.mxu0 0.0
    %98 = vmatprep.subr.mxu0 0.0
    %99 = vmatpush1.msra.mxu0 0.0
    %100 = vmatprep.subr.mxu0 %v70
    %101 = vmatpush1.msra.mxu0 %v67
    %102 = vmatprep.subr.mxu0 %v43
    %103 = vmatpush1.msra.mxu0 %v42
    %104 = vmatprep.subr.mxu0 0.0
    %105 = vmatpush2.msra.mxu0 0.0
    %106 = vmatprep.subr.mxu0 0.0
    %107 = vmatpush2.msra.mxu0 0.0
    %108 = vmatprep.subr.mxu0 0.0
    %109 = vmatpush2.msra.mxu0 0.0
    %110 = vmatprep.subr.mxu0 0.0
    %111 = vmatpush2.msra.mxu0 0.0
    %112 = vmatprep.subr.mxu0 0.0
    %113 = vmatpush2.msra.mxu0 0.0
    %114 = vmatprep.subr.mxu0 0.0
    %115 = vmatpush2.msra.mxu0 0.0
    %116 = vmatprep.subr.mxu0 0.0
    %117 = vmatpush2.msra.mxu0 0.0
    %118 = vmatprep.subr.mxu0 0.0
    %119 = vmatpush2.msra.mxu0 0.0
    %120 = vmatprep.subr.mxu0 0.0
    %121 = vmatpush2.msra.mxu0 0.0
    %122 = vmatprep.subr.mxu0 0.0
    %123 = vmatpush2.msra.mxu0 0.0
    %124 = vmatprep.subr.mxu0 0.0
    %125 = vmatpush2.msra.mxu0 0.0
    %126 = vmatprep.subr.mxu0 0.0
    %127 = vmatpush2.msra.mxu0 0.0
    %128 = vmatprep.subr.mxu0 0.0
    %129 = vmatpush2.msra.mxu0 0.0
    %130 = vmatprep.subr.mxu0 0.0
    %131 = vmatpush2.msra.mxu0 0.0
    %132 = vmatprep.subr.mxu0 0.0
    %133 = vmatpush2.msra.mxu0 0.0
    %134 = vmatprep.subr.mxu0 0.0
    %135 = vmatpush2.msra.mxu0 0.0
    %136 = vmatprep.mubr.f32.mxu0 0.0
    %137 = vmatmul.mubr.f32.gmra.mxu0 %v60
    %v138 = vpop.f32.mrf.mxu0
    %v139 = vadd.f32 %v51, %v138
    %v140 = vpop.f32.mrf.mxu0
    %v141 = vadd.f32 %v55, %v140
    %142 = vmatprep.mubr.f32.mxu0 0.0
    %143 = vmatmul.mubr.f32.gmra.mxu0 %v63
    %v144 = vpop.f32.mrf.mxu0
    %v145 = vadd.f32 %v51, %v144
    %v146 = vpop.f32.mrf.mxu0
    %v147 = vadd.f32 %v55, %v146
    %148 = vdwg.mxu0
    %v149 = vmax.f32 %v139, 0.0
    %v150 = vmax.f32 %v141, 0.0
    %v151 = vmax.f32 %v145, 0.0
    %v152 = vmax.f32 %v147, 0.0
    %v153 = vld [vmem:[#allocation2] sm:$0xff]
    %v154 = vld [vmem:[#allocation2 + $0x8] sm:$0xff]
    %v155 = vld [vmem:[#allocation2 + $0x10] sm:$0xff]
    %v156 = vld [vmem:[#allocation2 + $0x18] sm:$0xff]
    %v157 = vld [vmem:[#allocation2 + $0x20] sm:$0xff]
    %v158 = vld [vmem:[#allocation2 + $0x28] sm:$0xff]
    %v159 = vld [vmem:[#allocation2 + $0x30] sm:$0xff]
    %v160 = vld [vmem:[#allocation2 + $0x38] sm:$0xff]
    %v161 = vld [vmem:[#allocation2 + $0x40] sm:$0xff]
    %v162 = vld [vmem:[#allocation2 + $0x48] sm:$0xff]
    %v163 = vld [vmem:[#allocation2 + $0x50] sm:$0xff]
    %v164 = vld [vmem:[#allocation2 + $0x58] sm:$0xff]
    %v165 = vld [vmem:[#allocation2 + $0x60] sm:$0xff]
    %v166 = vld [vmem:[#allocation2 + $0x68] sm:$0xff]
    %v167 = vld [vmem:[#allocation2 + $0x70] sm:$0xff]
    %v168 = vld [vmem:[#allocation2 + $0x78] sm:$0xff]
    %v169 = vld [vmem:[#allocation2 + $0x80] sm:$0xff]
    %v170 = vld [vmem:[#allocation2 + $0x88] sm:$0xff]
    %v171 = vld [vmem:[#allocation2 + $0x90] sm:$0xff]
    %v172 = vld [vmem:[#allocation2 + $0x98] sm:$0xff]
    %v173 = vld [vmem:[#allocation2 + $0xa0] sm:$0xff]
    %v174 = vld [vmem:[#allocation2 + $0xa8] sm:$0xff]
    %v175 = vld [vmem:[#allocation2 + $0xb0] sm:$0xff]
    %v176 = vld [vmem:[#allocation2 + $0xb8] sm:$0xff]
    %v177 = vld [vmem:[#allocation2 + $0xc0] sm:$0xff]
    %v178 = vld [vmem:[#allocation2 + $0xc8] sm:$0xff]
    %v179 = vld [vmem:[#allocation2 + $0xd0] sm:$0xff]
    %v180 = vld [vmem:[#allocation2 + $0xd8] sm:$0xff]
    %v181 = vld [vmem:[#allocation2 + $0xe0] sm:$0xff]
    %v182 = vld [vmem:[#allocation2 + $0xe8] sm:$0xff]
    %v183 = vld [vmem:[#allocation2 + $0xf0] sm:$0xff]
    %v184 = vld [vmem:[#allocation2 + $0xf8] sm:$0xff]
    %v185 = vld [vmem:[#allocation2 + $0x100] sm:$0xff]
    %v186 = vld [vmem:[#allocation2 + $0x108] sm:$0xff]
    %v187 = vld [vmem:[#allocation2 + $0x110] sm:$0xff]
    %v188 = vld [vmem:[#allocation2 + $0x118] sm:$0xff]
    %v189 = vld [vmem:[#allocation2 + $0x120] sm:$0xff]
    %v190 = vld [vmem:[#allocation2 + $0x128] sm:$0xff]
    %v191 = vld [vmem:[#allocation2 + $0x130] sm:$0xff]
    %v192 = vld [vmem:[#allocation2 + $0x138] sm:$0xff]
    %v193 = vld [vmem:[#allocation2 + $0x140] sm:$0xff]
    %v194 = vld [vmem:[#allocation2 + $0x148] sm:$0xff]
    %v195 = vld [vmem:[#allocation2 + $0x150] sm:$0xff]
    %v196 = vld [vmem:[#allocation2 + $0x158] sm:$0xff]
    %v197 = vld [vmem:[#allocation2 + $0x160] sm:$0xff]
    %v198 = vld [vmem:[#allocation2 + $0x168] sm:$0xff]
    %v199 = vld [vmem:[#allocation2 + $0x170] sm:$0xff]
    %v200 = vld [vmem:[#allocation2 + $0x178] sm:$0xff]
    %v201 = vld [vmem:[#allocation2 + $0x180] sm:$0xff]
    %v202 = vld [vmem:[#allocation2 + $0x188] sm:$0xff]
    %v203 = vld [vmem:[#allocation2 + $0x190] sm:$0xff]
    %v204 = vld [vmem:[#allocation2 + $0x198] sm:$0xff]
    %v205 = vld [vmem:[#allocation2 + $0x1a0] sm:$0xff]
    %v206 = vld [vmem:[#allocation2 + $0x1a8] sm:$0xff]
    %v207 = vld [vmem:[#allocation2 + $0x1b0] sm:$0xff]
    %v208 = vld [vmem:[#allocation2 + $0x1b8] sm:$0xff]
    %v209 = vld [vmem:[#allocation2 + $0x1c0] sm:$0xff]
    %v210 = vld [vmem:[#allocation2 + $0x1c8] sm:$0xff]
    %v211 = vld [vmem:[#allocation2 + $0x1d0] sm:$0xff]
    %v212 = vld [vmem:[#allocation2 + $0x1d8] sm:$0xff]
    %v213 = vld [vmem:[#allocation2 + $0x1e0] sm:$0xff]
    %v214 = vld [vmem:[#allocation2 + $0x1e8] sm:$0xff]
    %v215 = vld [vmem:[#allocation2 + $0x1f0] sm:$0xff]
    %v216 = vld [vmem:[#allocation2 + $0x1f8] sm:$0xff]
    %v217 = vld [vmem:[%s4] sm:$0x3]
    %v219 = vlaneseq
    %v220 = vshrl.u32 %v219, 7
    %v221 = vsub.s32 0, %v220
    %v222 = vrot.slane %v217, %v221
    %v223 = vlaneseq
    %v224 = vshrl.u32 %v223, 7
    %v225 = vsub.s32 1, %v224
    %v226 = vrot.slane %v217, %v225
    %229 = vmatprep.subr.mxu0 %v184
    %230 = vmatpush1.msra.mxu0 %v183
    %231 = vmatprep.subr.mxu0 %v182
    %232 = vmatpush1.msra.mxu0 %v181
    %233 = vmatprep.subr.mxu0 %v180
    %234 = vmatpush1.msra.mxu0 %v179
    %235 = vmatprep.subr.mxu0 %v178
    %236 = vmatpush1.msra.mxu0 %v177
    %237 = vmatprep.subr.mxu0 %v176
    %238 = vmatpush1.msra.mxu0 %v175
    %239 = vmatprep.subr.mxu0 %v174
    %240 = vmatpush1.msra.mxu0 %v173
    %241 = vmatprep.subr.mxu0 %v172
    %242 = vmatpush1.msra.mxu0 %v171
    %243 = vmatprep.subr.mxu0 %v170
    %244 = vmatpush1.msra.mxu0 %v169
    %245 = vmatprep.subr.mxu0 %v168
    %246 = vmatpush1.msra.mxu0 %v167
    %247 = vmatprep.subr.mxu0 %v166
    %248 = vmatpush1.msra.mxu0 %v165
    %249 = vmatprep.subr.mxu0 %v164
    %250 = vmatpush1.msra.mxu0 %v163
    %251 = vmatprep.subr.mxu0 %v162
    %252 = vmatpush1.msra.mxu0 %v161
    %253 = vmatprep.subr.mxu0 %v160
    %254 = vmatpush1.msra.mxu0 %v159
    %255 = vmatprep.subr.mxu0 %v158
    %256 = vmatpush1.msra.mxu0 %v157
    %257 = vmatprep.subr.mxu0 %v156
    %258 = vmatpush1.msra.mxu0 %v155
    %259 = vmatprep.subr.mxu0 %v154
    %260 = vmatpush1.msra.mxu0 %v153
    %261 = vmatprep.subr.mxu0 %v216
    %262 = vmatpush2.msra.mxu0 %v215
    %263 = vmatprep.subr.mxu0 %v214
    %264 = vmatpush2.msra.mxu0 %v213
    %265 = vmatprep.subr.mxu0 %v212
    %266 = vmatpush2.msra.mxu0 %v211
    %267 = vmatprep.subr.mxu0 %v210
    %268 = vmatpush2.msra.mxu0 %v209
    %269 = vmatprep.subr.mxu0 %v208
    %270 = vmatpush2.msra.mxu0 %v207
    %271 = vmatprep.subr.mxu0 %v206
    %272 = vmatpush2.msra.mxu0 %v205
    %273 = vmatprep.subr.mxu0 %v204
    %274 = vmatpush2.msra.mxu0 %v203
    %275 = vmatprep.subr.mxu0 %v202
    %276 = vmatpush2.msra.mxu0 %v201
    %277 = vmatprep.subr.mxu0 %v200
    %278 = vmatpush2.msra.mxu0 %v199
    %279 = vmatprep.subr.mxu0 %v198
    %280 = vmatpush2.msra.mxu0 %v197
    %281 = vmatprep.subr.mxu0 %v196
    %282 = vmatpush2.msra.mxu0 %v195
    %283 = vmatprep.subr.mxu0 %v194
    %284 = vmatpush2.msra.mxu0 %v193
    %285 = vmatprep.subr.mxu0 %v192
    %286 = vmatpush2.msra.mxu0 %v191
    %287 = vmatprep.subr.mxu0 %v190
    %288 = vmatpush2.msra.mxu0 %v189
    %289 = vmatprep.subr.mxu0 %v188
    %290 = vmatpush2.msra.mxu0 %v187
    %291 = vmatprep.subr.mxu0 %v186
    %292 = vmatpush2.msra.mxu0 %v185
    %293 = vmatprep.mubr.f32.mxu0 %v150
    %294 = vmatmul.mubr.f32.gmra.mxu0 %v149
    %v295 = vpop.f32.mrf.mxu0
    %v296 = vadd.f32 %v222, %v295
    %v297 = vpop.f32.mrf.mxu0
    %v298 = vadd.f32 %v226, %v297
    %299 = vmatprep.mubr.f32.mxu0 %v152
    %300 = vmatmul.mubr.f32.gmra.mxu0 %v151
    %v301 = vpop.f32.mrf.mxu0
    %v302 = vadd.f32 %v222, %v301
    %v303 = vpop.f32.mrf.mxu0
    %v304 = vadd.f32 %v226, %v303
    %305 = vdwg.mxu0
    %v306 = vmax.f32 %v296, 0.0
    %v307 = vmax.f32 %v298, 0.0
    %v308 = vmax.f32 %v302, 0.0
    %v309 = vmax.f32 %v304, 0.0
    %v310 = vld [vmem:[%s5] sm:$0xff]
    %v311 = vld [vmem:[%s5 + $0x8] sm:$0xff]
    %v312 = vld [vmem:[%s5 + $0x10] sm:$0xff]
    %v313 = vld [vmem:[%s5 + $0x18] sm:$0xff]
    %v314 = vld [vmem:[%s5 + $0x20] sm:$0xff]
    %v315 = vld [vmem:[%s5 + $0x28] sm:$0xff]
    %v316 = vld [vmem:[%s5 + $0x30] sm:$0xff]
    %v317 = vld [vmem:[%s5 + $0x38] sm:$0xff]
    %v318 = vld [vmem:[%s5 + $0x40] sm:$0xff]
    %v319 = vld [vmem:[%s5 + $0x48] sm:$0xff]
    %v320 = vld [vmem:[%s5 + $0x50] sm:$0xff]
    %v321 = vld [vmem:[%s5 + $0x58] sm:$0xff]
    %v322 = vld [vmem:[%s5 + $0x60] sm:$0xff]
    %v323 = vld [vmem:[%s5 + $0x68] sm:$0xff]
    %v324 = vld [vmem:[%s5 + $0x70] sm:$0xff]
    %v325 = vld [vmem:[%s5 + $0x78] sm:$0xff]
    %v326 = vld [vmem:[%s5 + $0x80] sm:$0xff]
    %v327 = vld [vmem:[%s5 + $0x88] sm:$0xff]
    %v328 = vld [vmem:[%s5 + $0x90] sm:$0xff]
    %v329 = vld [vmem:[%s5 + $0x98] sm:$0xff]
    %v330 = vld [vmem:[%s5 + $0xa0] sm:$0xff]
    %v331 = vld [vmem:[%s5 + $0xa8] sm:$0xff]
    %v332 = vld [vmem:[%s5 + $0xb0] sm:$0xff]
    %v333 = vld [vmem:[%s5 + $0xb8] sm:$0xff]
    %v334 = vld [vmem:[%s5 + $0xc0] sm:$0xff]
    %v335 = vld [vmem:[%s5 + $0xc8] sm:$0xff]
    %v336 = vld [vmem:[%s5 + $0xd0] sm:$0xff]
    %v337 = vld [vmem:[%s5 + $0xd8] sm:$0xff]
    %v338 = vld [vmem:[%s5 + $0xe0] sm:$0xff]
    %v339 = vld [vmem:[%s5 + $0xe8] sm:$0xff]
    %v340 = vld [vmem:[%s5 + $0xf0] sm:$0xff]
    %v341 = vld [vmem:[%s5 + $0xf8] sm:$0xff]
    %v342 = vld [vmem:[%s6] sm:$0x1]
    %v344 = vlaneseq
    %v345 = vshrl.u32 %v344, 7
    %v346 = vsub.s32 0, %v345
    %v347 = vrot.slane %v342, %v346
    %349 = vmatprep.subr.mxu0 0.0
    %350 = vmatpush1.msra.mxu0 %v325
    %351 = vmatprep.subr.mxu0 0.0
    %352 = vmatpush1.msra.mxu0 %v324
    %353 = vmatprep.subr.mxu0 0.0
    %354 = vmatpush1.msra.mxu0 %v323
    %355 = vmatprep.subr.mxu0 0.0
    %356 = vmatpush1.msra.mxu0 %v322
    %357 = vmatprep.subr.mxu0 0.0
    %358 = vmatpush1.msra.mxu0 %v321
    %359 = vmatprep.subr.mxu0 0.0
    %360 = vmatpush1.msra.mxu0 %v320
    %361 = vmatprep.subr.mxu0 0.0
    %362 = vmatpush1.msra.mxu0 %v319
    %363 = vmatprep.subr.mxu0 0.0
    %364 = vmatpush1.msra.mxu0 %v318
    %365 = vmatprep.subr.mxu0 0.0
    %366 = vmatpush1.msra.mxu0 %v317
    %367 = vmatprep.subr.mxu0 0.0
    %368 = vmatpush1.msra.mxu0 %v316
    %369 = vmatprep.subr.mxu0 0.0
    %370 = vmatpush1.msra.mxu0 %v315
    %371 = vmatprep.subr.mxu0 0.0
    %372 = vmatpush1.msra.mxu0 %v314
    %373 = vmatprep.subr.mxu0 0.0
    %374 = vmatpush1.msra.mxu0 %v313
    %375 = vmatprep.subr.mxu0 0.0
    %376 = vmatpush1.msra.mxu0 %v312
    %377 = vmatprep.subr.mxu0 0.0
    %378 = vmatpush1.msra.mxu0 %v311
    %379 = vmatprep.subr.mxu0 0.0
    %380 = vmatpush1.msra.mxu0 %v310
    %381 = vmatprep.subr.mxu0 0.0
    %382 = vmatpush2.msra.mxu0 %v341
    %383 = vmatprep.subr.mxu0 0.0
    %384 = vmatpush2.msra.mxu0 %v340
    %385 = vmatprep.subr.mxu0 0.0
    %386 = vmatpush2.msra.mxu0 %v339
    %387 = vmatprep.subr.mxu0 0.0
    %388 = vmatpush2.msra.mxu0 %v338
    %389 = vmatprep.subr.mxu0 0.0
    %390 = vmatpush2.msra.mxu0 %v337
    %391 = vmatprep.subr.mxu0 0.0
    %392 = vmatpush2.msra.mxu0 %v336
    %393 = vmatprep.subr.mxu0 0.0
    %394 = vmatpush2.msra.mxu0 %v335
    %395 = vmatprep.subr.mxu0 0.0
    %396 = vmatpush2.msra.mxu0 %v334
    %397 = vmatprep.subr.mxu0 0.0
    %398 = vmatpush2.msra.mxu0 %v333
    %399 = vmatprep.subr.mxu0 0.0
    %400 = vmatpush2.msra.mxu0 %v332
    %401 = vmatprep.subr.mxu0 0.0
    %402 = vmatpush2.msra.mxu0 %v331
    %403 = vmatprep.subr.mxu0 0.0
    %404 = vmatpush2.msra.mxu0 %v330
    %405 = vmatprep.subr.mxu0 0.0
    %406 = vmatpush2.msra.mxu0 %v329
    %407 = vmatprep.subr.mxu0 0.0
    %408 = vmatpush2.msra.mxu0 %v328
    %409 = vmatprep.subr.mxu0 0.0
    %410 = vmatpush2.msra.mxu0 %v327
    %411 = vmatprep.subr.mxu0 0.0
    %412 = vmatpush2.msra.mxu0 %v326
    %413 = vmatprep.mubr.f32.mxu0 %v307
    %414 = vmatmul.mubr.f32.gmra.mxu0 %v306
    %v415 = vpop.f32.mrf.mxu0
    %v416 = vadd.f32 %v347, %v415
    %v417 = vpop.f32.mrf.mxu0
    %418 = vmatprep.mubr.f32.mxu0 %v309
    %419 = vmatmul.mubr.f32.gmra.mxu0 %v308
    %v420 = vpop.f32.mrf.mxu0
    %v421 = vadd.f32 %v347, %v420
    %v422 = vpop.f32.mrf.mxu0
    %423 = vdwg.mxu0
    %vm424 = vcmask 48128
    %425 = vst.msk [vmem:[%s7] sm:$0xff] %vm424, %v416
    %426 = vst.msk [vmem:[%s7 + $0x8] sm:$0xff] %vm424, %v421
    // Predicated region
    $region34: #{tpu_custom_call.1} parent=1 // pred_check
      _
    $region35: #{tpu_custom_call.1} parent=1 // pred_check_branch
      %428 = sbr.rel (0) target = $region37
    $region36: #{tpu_custom_call.1} parent=1 // pred_region
      _
    $region37: #{tpu_custom_call.1} parent=1 // pred_fallthru
      _
    // Predicated region
    $region38: #{tpu_custom_call.1} parent=1 // pred_check
      _
    $region39: #{tpu_custom_call.1} parent=1 // pred_check_branch
      %430 = sbr.rel (0) target = $region41
    $region40: #{tpu_custom_call.1} parent=1 // pred_region
      _
    $region41: #{tpu_custom_call.1} parent=1 // pred_fallthru
      _
    %431 = vsyncpa [#allocation3], 1

</llo_original>
